<compile_context>
chip_gen: v7x
topology: tpu7x:2x2x1
jax: 0.10.0
libtpu: 0.0.40
codegen_flags: <defaults>
</compile_context>

<pallas_src>
import math

import jax
import jax.numpy as jnp
from jax import lax
from jax.experimental import pallas as pl
from jax.experimental.pallas import tpu as pltpu


def _cdiv(a, b):
    return -(-a // b)


def _round_up(a, b):
    return _cdiv(a, b) * b


def _chip_config():
    """(ridge FLOP/byte per core, VMEM tile budget, vmem_limit_bytes, #TensorCores)."""
    kind = ""
    try:
        kind = jax.devices()[0].device_kind.lower()
    except Exception:
        pass
    if "v7" in kind:
        return 310.0, 24 * 2**20, 32 * 2**20, 2
    if "v6" in kind or "trillium" in kind:
        return 650.0, 24 * 2**20, 32 * 2**20, 1
    if "v5 lite" in kind or "v5e" in kind or "v5lite" in kind:
        return 240.0, 12 * 2**20, 20 * 2**20, 1
    # Conservative default (v4 / v5p / unknown): assume mem-bound, small tiles.
    return 240.0, 12 * 2**20, 20 * 2**20, 1


def _ablinear_fused_kernel(x_ref, w_ref, bias_ref, o_ref):
    # y = x @ W^T + bias with W = B_w @ A_w precomputed once in the wrapper.
    # dot_general contracts on the shared feature dim directly (no XLU transpose).
    y = lax.dot_general(x_ref[...], w_ref[...],
                        dimension_numbers=(((1,), (1,)), ((), ())),
                        preferred_element_type=jnp.float32)            # (tm, out)
    o_ref[...] = (y + bias_ref[...].astype(jnp.float32)).astype(o_ref.dtype)


def _ablinear_seq_kernel(x_ref, aw_ref, bw_ref, bias_ref, o_ref):
    # y = (x @ A^T) @ B^T + bias; rank is zero-padded to a multiple of 128 so h
    # is lane-dense and the second matmul has a clean MXU K dim.
    h = lax.dot_general(x_ref[...], aw_ref[...],
                        dimension_numbers=(((1,), (1,)), ((), ())),
                        preferred_element_type=jnp.float32)            # (tm, rank_pad)
    h = h.astype(x_ref.dtype)   # keep dtypes matched for the second MXU pass
    y = lax.dot_general(h, bw_ref[...],
                        dimension_numbers=(((1,), (1,)), ((), ())),
                        preferred_element_type=jnp.float32)            # (tm, out)
    o_ref[...] = (y + bias_ref[...].astype(jnp.float32)).astype(o_ref.dtype)


def ablinear_forward(x, a_weight, b_weight, bias, *, block_m_max=4096, path=None):
    """JAX/Pallas equivalent of ABLinear.forward.

    path: None (auto, roofline-based), "fused", or "seq" (both branches compute
    the identical function; the knob exists for testing / tuning).
    """
    *lead, in_features = x.shape
    out_features, rank = b_weight.shape
    assert a_weight.shape == (rank, in_features)
    assert bias.shape == (out_features,)

    m = math.prod(lead) if lead else 1
    x2 = x.reshape(m, in_features)

    itemsize = x.dtype.itemsize
    sublane = max(8, 32 // itemsize)          # dtype-aware: f32->8, bf16->16, int8->32
    ridge, vmem_target, vmem_limit, cores = _chip_config()

    # ---------- path selection (both paths are mathematically identical) ----------
    rank_pad = _round_up(rank, 128)
    fused_flops = 2 * m * in_features * out_features
    fused_bytes = itemsize * (m * in_features + m * out_features
                              + in_features * out_features + out_features)
    seq_flops = 2 * m * rank_pad * (in_features + out_features)
    fused_w_resident = 2 * itemsize * (in_features * out_features + out_features)
    use_fused = ((fused_flops / fused_bytes < ridge or fused_flops <= seq_flops)
                 and fused_w_resident <= vmem_target // 2)
    if path == "fused":
        use_fused = True
    elif path == "seq":
        use_fused = False

    bias2 = bias.reshape(1, out_features)

    if use_fused:
        # Hoisted: the tiny (out, in) product is computed exactly once, not per step.
        w = jnp.dot(b_weight, a_weight,
                    preferred_element_type=jnp.float32).astype(x.dtype)
        resident_bytes = 2 * itemsize * (w.size + out_features)       # double-buffered weights
        extra_row_f32 = 4 * out_features                              # f32 matmul result
        weight_args = (w,)
        weight_specs = [pl.BlockSpec((out_features, in_features), lambda i: (0, 0))]
        kernel = _ablinear_fused_kernel
        flops = fused_flops
        bytes_accessed = fused_bytes
    else:
        a_w = a_weight if rank_pad == rank else jnp.pad(
            a_weight, ((0, rank_pad - rank), (0, 0)))
        b_w = b_weight if rank_pad == rank else jnp.pad(
            b_weight, ((0, 0), (0, rank_pad - rank)))
        resident_bytes = 2 * itemsize * (a_w.size + b_w.size + out_features)
        extra_row_f32 = 4 * (rank_pad + out_features)                 # f32 h + result
        weight_args = (a_w, b_w)
        weight_specs = [pl.BlockSpec((rank_pad, in_features), lambda i: (0, 0)),
                        pl.BlockSpec((out_features, rank_pad), lambda i: (0, 0))]
        kernel = _ablinear_seq_kernel
        flops = seq_flops
        bytes_accessed = itemsize * (m * in_features + m * out_features
                                     + a_w.size + b_w.size + out_features)
    weight_specs.append(pl.BlockSpec((1, out_features), lambda i: (0, 0)))

    # ---------- M-axis tile: biggest that fits the per-generation VMEM budget ----------
    per_row_bytes = 2 * itemsize * (in_features + out_features) + extra_row_f32
    tm_cap = max(sublane, (vmem_target - resident_bytes) // per_row_bytes)
    tm = min(block_m_max, tm_cap, _round_up(m, sublane))
    if cores > 1 and m >= 2 * sublane:
        # v7x: keep >= 2 (balanced) grid steps so both TensorCores get work.
        tm = min(tm, _round_up(_cdiv(m, cores), sublane))
    tm = max(sublane, (tm // sublane) * sublane)

    # Ragged last block is masked by Pallas: no x padding, no output slicing.
    grid = (_cdiv(m, tm),)
    x_spec = pl.BlockSpec((tm, in_features), lambda i: (i, 0))
    out_spec = pl.BlockSpec((tm, out_features), lambda i: (i, 0))
    out_shape = jax.ShapeDtypeStruct((m, out_features), x.dtype)

    y = pl.pallas_call(
        kernel,
        out_shape=out_shape,
        grid_spec=pltpu.PrefetchScalarGridSpec(
            num_scalar_prefetch=0,
            grid=grid,
            in_specs=[x_spec] + weight_specs,
            out_specs=out_spec),
        compiler_params=pltpu.CompilerParams(
            dimension_semantics=("parallel",),
            vmem_limit_bytes=int(vmem_limit)),
        cost_estimate=pl.CostEstimate(flops=int(flops), transcendentals=0,
                                      bytes_accessed=int(bytes_accessed)),
    )(x2, *weight_args, bias2)

    return y.reshape(*lead, out_features)


def _reference(x, a_weight, b_weight, bias):
    # Pure-JAX reference (both module branches are mathematically identical).
    return x @ a_weight.T @ b_weight.T + bias


if __name__ == "__main__":
    key = jax.random.PRNGKey(0)
    k = jax.random.split(key, 8)

    in_f, out_f, rank = 32, 48, 4
    bound_a = 1.0 / math.sqrt(in_f)
    bound_b = 1.0 / math.sqrt(rank)
    a_w = jax.random.uniform(k[0], (rank, in_f), jnp.float32, -bound_a, bound_a)
    b_w = jax.random.uniform(k[1], (out_f, rank), jnp.float32, -bound_b, bound_b)
    b_bias = jax.random.uniform(k[2], (out_f,), jnp.float32, -bound_b, bound_b)

    cases = [
        # Small M (=16): auto path (HBM-bound -> fused single matmul), single tile.
        (jax.random.normal(k[3], (2, 8, in_f), jnp.float32), None),
        # Larger M (=1280): multiple / ragged grid steps, no wrapper pad or slice.
        (jax.random.normal(k[4], (8, 160, in_f), jnp.float32), None),
        # Explicitly exercise the sequential low-rank kernel (rank zero-padded to 128).
        (jax.random.normal(k[5], (4, 40, in_f), jnp.float32), "seq"),
    ]

    ok = True
    for x, path in cases:
        y = ablinear_forward(x, a_w, b_w, b_bias, path=path)
        jax.block_until_ready(y)
        y_ref = _reference(x, a_w, b_w, b_bias)
        if y.shape != y_ref.shape or not bool(
                jnp.allclose(y, y_ref, atol=1e-4, rtol=1e-4)):
            ok = False

    print("KERNEL_OK" if ok else "KERNEL_MISMATCH")
</pallas_src>

<mosaic_0001>
module attributes {stable_mosaic.version = 11 : i64} {
  func.func @_ablinear_fused_kernel(%arg0: i32, %arg1: memref<16x32xf32, #tpu.memory_space<vmem>>, %arg2: memref<48x32xf32, #tpu.memory_space<vmem>>, %arg3: memref<1x48xf32, #tpu.memory_space<vmem>>, %arg4: memref<16x48xf32, #tpu.memory_space<vmem>>) attributes {dimension_semantics = [#tpu.dimension_semantics<parallel>], iteration_bounds = array<i64: 1>, scalar_prefetch = 0 : i64, scratch_operands = 0 : i64, tpu.core_type = #tpu.core_type<tc>, window_params = [{transform_indices = @transform_0, window_bounds = array<i64: 16, 32>}, {pipeline_mode = #tpu.pipeline_mode<synchronous>, transform_indices = @transform_1, window_bounds = array<i64: 48, 32>}, {pipeline_mode = #tpu.pipeline_mode<synchronous>, transform_indices = @transform_2, window_bounds = array<i64: 1, 48>}, {transform_indices = @transform_3, window_bounds = array<i64: 16, 48>}]} {
    %c0 = arith.constant 0 : index
    %c0_0 = arith.constant 0 : index
    %0 = vector.load %arg1[%c0, %c0_0] : memref<16x32xf32, #tpu.memory_space<vmem>>, vector<16x32xf32>
    %c0_1 = arith.constant 0 : index
    %c0_2 = arith.constant 0 : index
    %1 = vector.load %arg2[%c0_1, %c0_2] : memref<48x32xf32, #tpu.memory_space<vmem>>, vector<48x32xf32>
    %cst = arith.constant dense<0.000000e+00> : vector<16x48xf32>
    %2 = tpu.matmul %0, %1, %cst {dimension_numbers = #tpu.dot_dimension_numbers<[1], [1], [0], [0], [0, 0, 1, 0], [], []>} : vector<16x32xf32>, vector<48x32xf32>, vector<16x48xf32> -> vector<16x48xf32>
    %c0_3 = arith.constant 0 : index
    %c0_4 = arith.constant 0 : index
    %3 = vector.load %arg3[%c0_3, %c0_4] : memref<1x48xf32, #tpu.memory_space<vmem>>, vector<1x48xf32>
    %4 = vector.broadcast %3 : vector<1x48xf32> to vector<16x48xf32>
    %5 = arith.addf %2, %4 : vector<16x48xf32>
    %c0_5 = arith.constant 0 : index
    %c0_6 = arith.constant 0 : index
    %6 = vector.load %arg4[%c0_5, %c0_6] : memref<16x48xf32, #tpu.memory_space<vmem>>, vector<16x48xf32>
    tpu.vector_store %arg4[%c0_5, %c0_6], %5 {strides = array<i32>} : memref<16x48xf32, #tpu.memory_space<vmem>>, vector<16x48xf32>,
    return
  }
  func.func @transform_0(%arg0: i32) -> (i32, i32) {
    %c0_i32 = arith.constant 0 : i32
    %c0_i32_0 = arith.constant 0 : i32
    return %arg0, %c0_i32 : i32, i32
  }
  func.func @transform_1(%arg0: i32) -> (i32, i32) {
    %c0_i32 = arith.constant 0 : i32
    %c0_i32_0 = arith.constant 0 : i32
    %c0_i32_1 = arith.constant 0 : i32
    return %c0_i32, %c0_i32_0 : i32, i32
  }
  func.func @transform_2(%arg0: i32) -> (i32, i32) {
    %c0_i32 = arith.constant 0 : i32
    %c0_i32_0 = arith.constant 0 : i32
    %c0_i32_1 = arith.constant 0 : i32
    return %c0_i32, %c0_i32_0 : i32, i32
  }
  func.func @transform_3(%arg0: i32) -> (i32, i32) {
    %c0_i32 = arith.constant 0 : i32
    %c0_i32_0 = arith.constant 0 : i32
    return %arg0, %c0_i32 : i32, i32
  }
}

</mosaic_0001>

<llo_original>
// kernel: tpu_custom_call.1
$region0: #{tpu_custom_call.1}
  #allocation0 [shape = 'u32[]', space=smem, size = 0x4, offset = 0x4, fixed_abs, tag = 'smem constant byte address 0x4 - core index']
  #allocation1 [shape = 'u32[144,128]{1,0:T(1,128)}', space=vmem, size = 0x12000, scoped, tag = 'internal scratch']
  %s0 = inlined_call_operand.vmem [shape: f32[16,32], index: 0, kind: input, shape index: {}]
  %s1 = inlined_call_operand.vmem [shape: f32[48,32], index: 1, kind: input, shape index: {}]
  %s2 = inlined_call_operand.vmem [shape: f32[1,48], index: 2, kind: input, shape index: {}]
  %s3 = inlined_call_operand.hbm [shape: f32[16,48], index: 3, kind: output, shape index: {}]
  %s4 = sld [smem:[#allocation0]]
  $region22: #{tpu_custom_call.1} parent=0
    _
  %s6 = ssub.s32 1, %s4
  %s7 = scalar_select 0, %s6, %s4
  $region1: #{tpu_custom_call.1} parent=0
    #allocation2 [shape = 'u8[8192]{0}', space=vmem, size = 0x2000, scoped, tag = 'output window, operand 0, single buffered']
    #allocation3 [shape = 's32[1]{0}', space=sflag, size = 0x4, scoped, tag = 'scoped memory for tpu_custom_call.1']
    %8 = vsyncpa [#allocation3], 0
    // Predicated region
    $region2: #{tpu_custom_call.1} parent=1 // pred_check
      _
    $region3: #{tpu_custom_call.1} parent=1 // pred_check_branch
      %10 = sbr.rel (0) target = $region5
    $region4: #{tpu_custom_call.1} parent=1 // pred_region
      _
    $region5: #{tpu_custom_call.1} parent=1 // pred_fallthru
      _
    // Predicated region
    $region6: #{tpu_custom_call.1} parent=1 // pred_check
      _
    $region7: #{tpu_custom_call.1} parent=1 // pred_check_branch
      %12 = sbr.rel (0) target = $region9
    $region8: #{tpu_custom_call.1} parent=1 // pred_region
      _
    $region9: #{tpu_custom_call.1} parent=1 // pred_fallthru
      _
    // Predicated region
    $region10: #{tpu_custom_call.1} parent=1 // pred_check
      _
    $region11: #{tpu_custom_call.1} parent=1 // pred_check_branch
      %14 = sbr.rel (0) target = $region13
    $region12: #{tpu_custom_call.1} parent=1 // pred_region
      _
    $region13: #{tpu_custom_call.1} parent=1 // pred_fallthru
      _
    %v15 = vld [vmem:[%s0] sm:$0xff]
    %v16 = vld [vmem:[%s0 + $0x8] sm:$0xff]
    %v17 = vld [vmem:[%s1] sm:$0xff]
    %v18 = vld [vmem:[%s1 + $0x8] sm:$0xff]
    %v19 = vld [vmem:[%s1 + $0x10] sm:$0xff]
    %v20 = vld [vmem:[%s1 + $0x18] sm:$0xff]
    %v21 = vld [vmem:[%s1 + $0x20] sm:$0xff]
    %v22 = vld [vmem:[%s1 + $0x28] sm:$0xff]
    %v23 = vld [vmem:[%s2] sm:$0x1]
    %v25 = vlaneseq
    %v26 = vshrl.u32 %v25, 7
    %v27 = vsub.s32 0, %v26
    %v28 = vrot.slane %v23, %v27
    %vm30 = vcmask 261120
    %v32 = vsel %vm30, %v15, 0
    %v35 = vsel %vm30, %v16, 0
    %v38 = vsel %vm30, %v17, 0
    %v41 = vsel %vm30, %v18, 0
    %v44 = vsel %vm30, %v19, 0
    %v47 = vsel %vm30, %v20, 0
    %v50 = vsel %vm30, %v21, 0
    %v53 = vsel %vm30, %v22, 0
    %55 = vmatprep.subr.mxu0 0.0
    %56 = vmatpush1.xpose.msra.mxu0 %v38
    %57 = vmatprep.subr.mxu0 0.0
    %58 = vmatpush1.xpose.msra.mxu0 %v41
    %59 = vmatprep.subr.mxu0 0.0
    %60 = vmatpush1.xpose.msra.mxu0 %v44
    %61 = vmatprep.subr.mxu0 0.0
    %62 = vmatpush1.xpose.msra.mxu0 %v47
    %63 = vmatprep.subr.mxu0 0.0
    %64 = vmatpush1.xpose.msra.mxu0 %v50
    %65 = vmatprep.subr.mxu0 0.0
    %66 = vmatpush1.xpose.msra.mxu0 %v53
    %67 = vmatprep.subr.mxu0 0.0
    %68 = vmatpush1.xpose.msra.mxu0 0.0
    %69 = vmatprep.subr.mxu0 0.0
    %70 = vmatpush1.xpose.msra.mxu0 0.0
    %71 = vmatprep.subr.mxu0 0.0
    %72 = vmatpush1.xpose.msra.mxu0 0.0
    %73 = vmatprep.subr.mxu0 0.0
    %74 = vmatpush1.xpose.msra.mxu0 0.0
    %75 = vmatprep.subr.mxu0 0.0
    %76 = vmatpush1.xpose.msra.mxu0 0.0
    %77 = vmatprep.subr.mxu0 0.0
    %78 = vmatpush1.xpose.msra.mxu0 0.0
    %79 = vmatprep.subr.mxu0 0.0
    %80 = vmatpush1.xpose.msra.mxu0 0.0
    %81 = vmatprep.subr.mxu0 0.0
    %82 = vmatpush1.xpose.msra.mxu0 0.0
    %83 = vmatprep.subr.mxu0 0.0
    %84 = vmatpush1.xpose.msra.mxu0 0.0
    %85 = vmatprep.subr.mxu0 0.0
    %86 = vmatpush1.xpose.msra.mxu0 0.0
    %87 = vmatprep.subr.mxu0 0.0
    %88 = vmatpush1.xpose.msra.mxu0 0.0
    %89 = vmatprep.subr.mxu0 0.0
    %90 = vmatpush1.xpose.msra.mxu0 0.0
    %91 = vmatprep.subr.mxu0 0.0
    %92 = vmatpush1.xpose.msra.mxu0 0.0
    %93 = vmatprep.subr.mxu0 0.0
    %94 = vmatpush1.xpose.msra.mxu0 0.0
    %95 = vmatprep.subr.mxu0 0.0
    %96 = vmatpush1.xpose.msra.mxu0 0.0
    %97 = vmatprep.subr.mxu0 0.0
    %98 = vmatpush1.xpose.msra.mxu0 0.0
    %99 = vmatprep.subr.mxu0 0.0
    %100 = vmatpush1.xpose.msra.mxu0 0.0
    %101 = vmatprep.subr.mxu0 0.0
    %102 = vmatpush1.xpose.msra.mxu0 0.0
    %103 = vmatprep.subr.mxu0 0.0
    %104 = vmatpush1.xpose.msra.mxu0 0.0
    %105 = vmatprep.subr.mxu0 0.0
    %106 = vmatpush1.xpose.msra.mxu0 0.0
    %107 = vmatprep.subr.mxu0 0.0
    %108 = vmatpush1.xpose.msra.mxu0 0.0
    %109 = vmatprep.subr.mxu0 0.0
    %110 = vmatpush1.xpose.msra.mxu0 0.0
    %111 = vmatprep.subr.mxu0 0.0
    %112 = vmatpush1.xpose.msra.mxu0 0.0
    %113 = vmatprep.subr.mxu0 0.0
    %114 = vmatpush1.xpose.msra.mxu0 0.0
    %115 = vmatprep.subr.mxu0 0.0
    %116 = vmatpush1.xpose.msra.mxu0 0.0
    %117 = vmatprep.subr.mxu0 0.0
    %118 = vmatpush1.xpose.msra.mxu0 0.0
    %119 = vmatprep.mubr.f32.mxu0 0.0
    %120 = vmatmul.mubr.f32.gmra.mrb[0].mxu0 %v32
    %v121 = vpop.f32.mrb[0].mxu0
    %v122 = vadd.f32 %v28, %v121
    %v123 = vpop.f32.mrb[0].mxu0
    %124 = vmatprep.mubr.f32.mxu0 0.0
    %125 = vmatmul.mubr.f32.gmra.mrb[0].mxu0 %v35
    %v126 = vpop.f32.mrb[0].mxu0
    %v127 = vadd.f32 %v28, %v126
    %v128 = vpop.f32.mrb[0].mxu0
    %129 = vdwg.mxu0
    %vm130 = vcmask 392192
    %131 = vst.msk [vmem:[#allocation2] sm:$0xff] %vm130, %v122
    %132 = vst.msk [vmem:[#allocation2 + $0x8] sm:$0xff] %vm130, %v127
    // Predicated region
    $region14: #{tpu_custom_call.1} parent=1 // pred_check
      _
    $region15: #{tpu_custom_call.1} parent=1 // pred_check_branch
      %134 = sbr.rel (0) target = $region17
    $region16: #{tpu_custom_call.1} parent=1 // pred_region
      %s136 = ssub.s32 256, 256
      %137 = vsyncadd [#allocation3], %s136
      %s138 = sshll.u32 [#allocation2], 4
      %s139 = int_to_ptr.vmem [resolvable:$true] %s138
      %144 = dma.vmem_to_hbm [thread:$0]  %s139, 256, %s3, [#allocation3], 128, 128, 8
    $region17: #{tpu_custom_call.1} parent=1 // pred_fallthru
      _
    // Predicated region
    $region18: #{tpu_custom_call.1} parent=1 // pred_check
      _
    $region19: #{tpu_custom_call.1} parent=1 // pred_check_branch
      %146 = sbr.rel (0) target = $region21
    $region20: #{tpu_custom_call.1} parent=1 // pred_region
      %147 = dma.done [#allocation3], 256
    $region21: #{tpu_custom_call.1} parent=1 // pred_fallthru
      _
    %148 = vsyncpa [#allocation3], 1

</llo_original>
